<compile_context>
chip_gen: v7x
topology: tpu7x:2x2x1
jax: 0.10.0
libtpu: 0.0.40
codegen_flags: <defaults>
</compile_context>

<pallas_src>
import functools

import jax
import jax.numpy as jnp
from jax.experimental import pallas as pl
from jax.experimental.pallas import tpu as pltpu


def _round_up(n, m):
    return ((n + m - 1) // m) * m


def _vmem_budget_bytes():
    """~85% of this generation's physical VMEM (conservative fallback: 64 MiB)."""
    try:
        cap = int(pltpu.get_tpu_info().vmem_capacity_bytes)
    except Exception:
        cap = 64 * 1024 * 1024
    return int(cap * 0.85)


# ----------------------------------------------------------------------------
# Streaming kernel: grid = (batch_tiles, layers); one inner step == one layer.
# ----------------------------------------------------------------------------
def _multi_mlp_stream_kernel(x_ref, w1_ref, b1_ref, w2_ref, b2_ref, o_ref):
    """x_ref:(Bt,Dp) low-precision input; w*:(1,Dp,Dp); b*:(1,Dp) f32;
    o_ref:(Bt,Dp) f32 output block whose index is constant along the layer
    axis, so it stays VMEM-resident and doubles as the layer-to-layer carry."""
    layer = pl.program_id(1)

    @pl.when(layer == 0)
    def _():
        o_ref[...] = x_ref[...].astype(o_ref.dtype)

    h = o_ref[...]

    # net1: Linear -> ReLU (bf16 MXU inputs, f32 accumulation).
    z = jnp.dot(h.astype(w1_ref.dtype), w1_ref[0],
                preferred_element_type=jnp.float32)
    z = jnp.maximum(z + b1_ref[0, :], 0.0)

    # net2: Linear.
    y = jnp.dot(z.astype(w2_ref.dtype), w2_ref[0],
                preferred_element_type=jnp.float32)
    o_ref[...] = (y + b2_ref[0, :]).astype(o_ref.dtype)


# ----------------------------------------------------------------------------
# Resident kernel: whole (unpadded) weight stacks live in VMEM; layers are
# looped inside a single grid step (grid only over batch tiles).
# ----------------------------------------------------------------------------
def _multi_mlp_resident_kernel(x_ref, w1_ref, b1_ref, w2_ref, b2_ref, o_ref):
    """x_ref:(Bt,D) f32; w*:(L,D,D); b*:(L,1,D) f32; o_ref:(Bt,D) f32."""
    n_layers = w1_ref.shape[0]
    h0 = x_ref[...].astype(jnp.float32)

    def layer_body(l, h):
        w1 = w1_ref[l]                       # (D, D)
        z = jnp.dot(h.astype(w1.dtype), w1, preferred_element_type=jnp.float32)
        z = jnp.maximum(z + b1_ref[l], 0.0)  # b1_ref[l]: (1, D), broadcasts
        w2 = w2_ref[l]
        y = jnp.dot(z.astype(w2.dtype), w2, preferred_element_type=jnp.float32)
        return y + b2_ref[l]

    if n_layers <= 8:
        h = h0
        for l in range(n_layers):            # static unroll, static ref indices
            h = layer_body(l, h)
    else:
        h = jax.lax.fori_loop(0, n_layers, layer_body, h0)

    o_ref[...] = h.astype(o_ref.dtype)


# ----------------------------------------------------------------------------
# One-time parameter preparation (hoisted out of the per-call path).
# ----------------------------------------------------------------------------
def prepare_multi_mlp_params(w1s, b1s, w2s, b2s, *,
                             weight_dtype=jnp.bfloat16,
                             resident_weight_bytes_limit=4 * 1024 * 1024):
    """Pad / cast weights ONCE. Returns (w1p, b1p, w2p, b2p).

    Small total weight footprint  -> resident form: unpadded (L,D,D) weights in
                                     `weight_dtype`, biases reshaped to (L,1,D).
    Otherwise                     -> streaming form: D padded to a multiple of
                                     128, weights cast to `weight_dtype`,
                                     biases (L,Dp) f32.
    """
    L, D, _ = w1s.shape
    w_itemsize = jnp.dtype(weight_dtype).itemsize

    if 2 * L * D * D * w_itemsize <= resident_weight_bytes_limit:
        return (w1s.astype(weight_dtype),
                b1s.astype(jnp.float32)[:, None, :],
                w2s.astype(weight_dtype),
                b2s.astype(jnp.float32)[:, None, :])

    D_pad = _round_up(max(D, 128), 128)
    pad = ((0, 0), (0, D_pad - D), (0, D_pad - D))
    w1p = jnp.pad(w1s, pad).astype(weight_dtype)
    w2p = jnp.pad(w2s, pad).astype(weight_dtype)
    b1p = jnp.pad(b1s, ((0, 0), (0, D_pad - D))).astype(jnp.float32)
    b2p = jnp.pad(b2s, ((0, 0), (0, D_pad - D))).astype(jnp.float32)
    return w1p, b1p, w2p, b2p


# ----------------------------------------------------------------------------
# Forward
# ----------------------------------------------------------------------------
@functools.partial(jax.jit, static_argnames=("block_b", "extra_weight_buffering"))
def multi_mlp_forward(x, w1p, b1p, w2p, b2p, *,
                      block_b=None, extra_weight_buffering=False):
    """x: (B, D) f32. Prepared params from prepare_multi_mlp_params()."""
    B, D = x.shape
    resident = (b1p.ndim == 3)   # static at trace time

    # ----------------------- resident (small-weight) path -------------------
    if resident:
        L = w1p.shape[0]
        B_pad = _round_up(max(B, 8), 8)
        if B_pad <= 2048:
            block_b_res = B_pad
        else:
            block_b_res = 1024
            B_pad = _round_up(B_pad, block_b_res)
        num_bt = B_pad // block_b_res

        xp = jnp.pad(x.astype(jnp.float32), ((0, B_pad - B), (0, 0)))

        w_itemsize = jnp.dtype(w1p.dtype).itemsize
        need = (2 * 2 * L * D * D * w_itemsize     # weight stacks (2 bufs worst case)
                + 2 * 2 * L * D * 4                # biases
                + 2 * block_b_res * D * 4          # x block
                + 2 * block_b_res * D * 4          # out block
                + 2 * block_b_res * D * 4          # f32 carry + z intermediate
                + 2 * block_b_res * D * 2)         # bf16 cast temporaries
        vmem_limit = int(min(max(need * 2, 32 * 1024 * 1024), _vmem_budget_bytes()))

        grid_spec = pltpu.PrefetchScalarGridSpec(
            num_scalar_prefetch=0,
            grid=(num_bt,),
            in_specs=[
                pl.BlockSpec((block_b_res, D), lambda i: (i, 0)),     # x
                pl.BlockSpec((L, D, D), lambda i: (0, 0, 0)),         # w1 stack
                pl.BlockSpec((L, 1, D), lambda i: (0, 0, 0)),         # b1 stack
                pl.BlockSpec((L, D, D), lambda i: (0, 0, 0)),         # w2 stack
                pl.BlockSpec((L, 1, D), lambda i: (0, 0, 0)),         # b2 stack
            ],
            out_specs=pl.BlockSpec((block_b_res, D), lambda i: (i, 0)),
        )
        out = pl.pallas_call(
            _multi_mlp_resident_kernel,
            out_shape=jax.ShapeDtypeStruct((B_pad, D), jnp.float32),
            grid_spec=grid_spec,
            compiler_params=pltpu.CompilerParams(
                dimension_semantics=("arbitrary",),
                vmem_limit_bytes=vmem_limit,
            ),
        )(xp, w1p, b1p, w2p, b2p)
        return out[:B, :D]

    # ----------------------------- streaming path ---------------------------
    L, D_pad, _ = w1p.shape
    x_dtype = w1p.dtype if jnp.issubdtype(w1p.dtype, jnp.floating) else jnp.bfloat16
    w_itemsize = jnp.dtype(w1p.dtype).itemsize
    x_itemsize = jnp.dtype(x_dtype).itemsize

    B_pad = _round_up(max(B, 8), 8)
    if block_b is None:
        block_b_eff = B_pad
        num_bt = 1
    else:
        # Megacore split only pays when the per-core tile is compute-bound
        # (weights are re-streamed per tile); require >= 256 MXU-aligned rows.
        block_b_eff = _round_up(max(int(block_b), 256), 256)
        if block_b_eff >= B_pad:
            block_b_eff = B_pad
            num_bt = 1
        else:
            B_pad = _round_up(B_pad, block_b_eff)
            num_bt = B_pad // block_b_eff

    # Only the (cheap) input pad/cast stays in the per-call path.
    xp = jnp.pad(x.astype(x_dtype), ((0, B_pad - B), (0, D_pad - D)))

    w_bufs = 3 if extra_weight_buffering else 2
    need = (w_bufs * 2 * D_pad * D_pad * w_itemsize   # w1 + w2 streaming buffers
            + 2 * 2 * D_pad * 4                        # b1 + b2 buffers
            + 2 * block_b_eff * D_pad * x_itemsize     # x block (low precision)
            + 2 * block_b_eff * D_pad * 4              # resident output / carry
            + block_b_eff * D_pad * 4                  # f32 z intermediate
            + 2 * block_b_eff * D_pad * 2)             # bf16 cast temporaries
    vmem_limit = int(min(max(need * 3 // 2, 32 * 1024 * 1024), _vmem_budget_bytes()))

    # Buffered(3) only helps when per-layer compute hides weight-DMA latency
    # jitter (compute-bound regime); leave off when purely bandwidth-bound.
    w_kwargs = {"pipeline_mode": pl.Buffered(3)} if extra_weight_buffering else {}

    grid_spec = pltpu.PrefetchScalarGridSpec(
        num_scalar_prefetch=0,
        grid=(num_bt, L),
        in_specs=[
            pl.BlockSpec((block_b_eff, D_pad), lambda bt, l: (bt, 0)),             # x
            pl.BlockSpec((1, D_pad, D_pad), lambda bt, l: (l, 0, 0), **w_kwargs),  # w1
            pl.BlockSpec((1, D_pad), lambda bt, l: (l, 0)),                        # b1
            pl.BlockSpec((1, D_pad, D_pad), lambda bt, l: (l, 0, 0), **w_kwargs),  # w2
            pl.BlockSpec((1, D_pad), lambda bt, l: (l, 0)),                        # b2
        ],
        out_specs=pl.BlockSpec((block_b_eff, D_pad), lambda bt, l: (bt, 0)),
    )

    out = pl.pallas_call(
        _multi_mlp_stream_kernel,
        out_shape=jax.ShapeDtypeStruct((B_pad, D_pad), jnp.float32),
        grid_spec=grid_spec,
        compiler_params=pltpu.CompilerParams(
            dimension_semantics=("parallel", "arbitrary"),
            vmem_limit_bytes=vmem_limit,
        ),
    )(xp, w1p, b1p, w2p, b2p)

    return out[:B, :D]


# ----------------------------------------------------------------------------
# Init + reference
# ----------------------------------------------------------------------------
def init_multi_mlp_params(key, d_hid, n_layers):
    """Deterministic init mirroring nn.Linear's uniform(-1/sqrt(fan_in), +)."""
    bound = 1.0 / jnp.sqrt(jnp.float32(d_hid))
    keys = jax.random.split(key, 4)
    # Weights stored pre-transposed: (layer, in, out) so the kernel does x @ W.
    w1s = jax.random.uniform(keys[0], (n_layers, d_hid, d_hid), jnp.float32, -bound, bound)
    b1s = jax.random.uniform(keys[1], (n_layers, d_hid), jnp.float32, -bound, bound)
    w2s = jax.random.uniform(keys[2], (n_layers, d_hid, d_hid), jnp.float32, -bound, bound)
    b2s = jax.random.uniform(keys[3], (n_layers, d_hid), jnp.float32, -bound, bound)
    return w1s, b1s, w2s, b2s


def multi_mlp_reference(x, w1s, b1s, w2s, b2s, weight_dtype=jnp.bfloat16):
    """Pure-JAX reference mirroring the kernel's precision strategy (bf16
    weights / activation casts, f32 accumulation).  Note: bf16 re-quantization
    per layer compounds with depth; keep tolerances in lockstep for deep stacks."""
    f32 = jnp.float32
    h = x.astype(f32)
    for l in range(w1s.shape[0]):
        w1 = w1s[l].astype(weight_dtype).astype(f32)
        w2 = w2s[l].astype(weight_dtype).astype(f32)
        hq = h.astype(weight_dtype).astype(f32)
        z = jnp.maximum(hq @ w1 + b1s[l].astype(f32), 0.0)
        zq = z.astype(weight_dtype).astype(f32)
        h = zq @ w2 + b2s[l].astype(f32)
    return h


if __name__ == "__main__":
    d_hid = 32
    n_layers = 2
    batch = 8

    key = jax.random.PRNGKey(0)
    k_x, k_p = jax.random.split(key)

    x = jax.random.normal(k_x, (batch, d_hid), dtype=jnp.float32)
    w1s, b1s, w2s, b2s = init_multi_mlp_params(k_p, d_hid, n_layers)
    ref = multi_mlp_reference(x, w1s, b1s, w2s, b2s)

    # Fast (weight-resident) path: the natural path for this small config.
    p_fast = prepare_multi_mlp_params(w1s, b1s, w2s, b2s)
    out_fast = jax.block_until_ready(multi_mlp_forward(x, *p_fast))
    assert out_fast.shape == (batch, d_hid)
    assert jnp.allclose(out_fast, ref, atol=5e-4, rtol=5e-4), \
        "resident-path output mismatch vs reference"

    # Layer-streaming path (forced) to exercise the pipelined kernel as well.
    p_stream = prepare_multi_mlp_params(w1s, b1s, w2s, b2s,
                                        resident_weight_bytes_limit=0)
    out_stream = jax.block_until_ready(multi_mlp_forward(x, *p_stream))
    assert out_stream.shape == (batch, d_hid)
    assert jnp.allclose(out_stream, ref, atol=5e-4, rtol=5e-4), \
        "streaming-path output mismatch vs reference"

    print("KERNEL_OK")
</pallas_src>

<mosaic_0001>
module attributes {stable_mosaic.version = 11 : i64} {
  func.func @_multi_mlp_resident_kernel(%arg0: i32, %arg1: memref<8x32xf32, #tpu.memory_space<vmem>>, %arg2: memref<2x32x32xbf16, #tpu.memory_space<vmem>>, %arg3: memref<2x1x32xf32, #tpu.memory_space<vmem>>, %arg4: memref<2x32x32xbf16, #tpu.memory_space<vmem>>, %arg5: memref<2x1x32xf32, #tpu.memory_space<vmem>>, %arg6: memref<8x32xf32, #tpu.memory_space<vmem>>) attributes {dimension_semantics = [#tpu.dimension_semantics<arbitrary>], iteration_bounds = array<i64: 1>, scalar_prefetch = 0 : i64, scratch_operands = 0 : i64, tpu.core_type = #tpu.core_type<tc>, window_params = [{transform_indices = @transform_0, window_bounds = array<i64: 8, 32>}, {pipeline_mode = #tpu.pipeline_mode<synchronous>, transform_indices = @transform_1, window_bounds = array<i64: 2, 32, 32>}, {pipeline_mode = #tpu.pipeline_mode<synchronous>, transform_indices = @transform_2, window_bounds = array<i64: 2, 1, 32>}, {pipeline_mode = #tpu.pipeline_mode<synchronous>, transform_indices = @transform_3, window_bounds = array<i64: 2, 32, 32>}, {pipeline_mode = #tpu.pipeline_mode<synchronous>, transform_indices = @transform_4, window_bounds = array<i64: 2, 1, 32>}, {transform_indices = @transform_5, window_bounds = array<i64: 8, 32>}]} {
    %c0 = arith.constant 0 : index
    %c0_0 = arith.constant 0 : index
    %0 = vector.load %arg1[%c0, %c0_0] : memref<8x32xf32, #tpu.memory_space<vmem>>, vector<8x32xf32>
    %c0_1 = arith.constant 0 : index
    %c0_2 = arith.constant 0 : index
    %c0_3 = arith.constant 0 : index
    %1 = vector.load %arg2[%c0_1, %c0_2, %c0_3] : memref<2x32x32xbf16, #tpu.memory_space<vmem>>, vector<1x32x32xbf16>
    %2 = vector.shape_cast %1 : vector<1x32x32xbf16> to vector<32x32xbf16>
    %3 = arith.truncf %0 : vector<8x32xf32> to vector<8x32xbf16>
    %cst = arith.constant dense<0.000000e+00> : vector<8x32xf32>
    %4 = tpu.matmul %3, %2, %cst {dimension_numbers = #tpu.dot_dimension_numbers<[1], [0], [0], [1], [0, 0, 1, 1], [], []>} : vector<8x32xbf16>, vector<32x32xbf16>, vector<8x32xf32> -> vector<8x32xf32>
    %c0_4 = arith.constant 0 : index
    %c0_5 = arith.constant 0 : index
    %c0_6 = arith.constant 0 : index
    %5 = vector.load %arg3[%c0_4, %c0_5, %c0_6] : memref<2x1x32xf32, #tpu.memory_space<vmem>>, vector<1x1x32xf32>
    %6 = vector.shape_cast %5 : vector<1x1x32xf32> to vector<1x32xf32>
    %7 = vector.broadcast %6 : vector<1x32xf32> to vector<8x32xf32>
    %8 = arith.addf %4, %7 : vector<8x32xf32>
    %cst_7 = arith.constant 0.000000e+00 : f32
    %9 = vector.broadcast %cst_7 : f32 to vector<8x32xf32>
    %10 = arith.maximumf %8, %9 : vector<8x32xf32>
    %c0_8 = arith.constant 0 : index
    %c0_9 = arith.constant 0 : index
    %c0_10 = arith.constant 0 : index
    %11 = vector.load %arg4[%c0_8, %c0_9, %c0_10] : memref<2x32x32xbf16, #tpu.memory_space<vmem>>, vector<1x32x32xbf16>
    %12 = vector.shape_cast %11 : vector<1x32x32xbf16> to vector<32x32xbf16>
    %13 = arith.truncf %10 : vector<8x32xf32> to vector<8x32xbf16>
    %cst_11 = arith.constant dense<0.000000e+00> : vector<8x32xf32>
    %14 = tpu.matmul %13, %12, %cst_11 {dimension_numbers = #tpu.dot_dimension_numbers<[1], [0], [0], [1], [0, 0, 1, 1], [], []>} : vector<8x32xbf16>, vector<32x32xbf16>, vector<8x32xf32> -> vector<8x32xf32>
    %c0_12 = arith.constant 0 : index
    %c0_13 = arith.constant 0 : index
    %c0_14 = arith.constant 0 : index
    %15 = vector.load %arg5[%c0_12, %c0_13, %c0_14] : memref<2x1x32xf32, #tpu.memory_space<vmem>>, vector<1x1x32xf32>
    %16 = vector.shape_cast %15 : vector<1x1x32xf32> to vector<1x32xf32>
    %17 = vector.broadcast %16 : vector<1x32xf32> to vector<8x32xf32>
    %18 = arith.addf %14, %17 : vector<8x32xf32>
    %c1 = arith.constant 1 : index
    %c0_15 = arith.constant 0 : index
    %c0_16 = arith.constant 0 : index
    %19 = vector.load %arg2[%c1, %c0_15, %c0_16] : memref<2x32x32xbf16, #tpu.memory_space<vmem>>, vector<1x32x32xbf16>
    %20 = vector.shape_cast %19 : vector<1x32x32xbf16> to vector<32x32xbf16>
    %21 = arith.truncf %18 : vector<8x32xf32> to vector<8x32xbf16>
    %cst_17 = arith.constant dense<0.000000e+00> : vector<8x32xf32>
    %22 = tpu.matmul %21, %20, %cst_17 {dimension_numbers = #tpu.dot_dimension_numbers<[1], [0], [0], [1], [0, 0, 1, 1], [], []>} : vector<8x32xbf16>, vector<32x32xbf16>, vector<8x32xf32> -> vector<8x32xf32>
    %c1_18 = arith.constant 1 : index
    %c0_19 = arith.constant 0 : index
    %c0_20 = arith.constant 0 : index
    %23 = vector.load %arg3[%c1_18, %c0_19, %c0_20] : memref<2x1x32xf32, #tpu.memory_space<vmem>>, vector<1x1x32xf32>
    %24 = vector.shape_cast %23 : vector<1x1x32xf32> to vector<1x32xf32>
    %25 = vector.broadcast %24 : vector<1x32xf32> to vector<8x32xf32>
    %26 = arith.addf %22, %25 : vector<8x32xf32>
    %cst_21 = arith.constant 0.000000e+00 : f32
    %27 = vector.broadcast %cst_21 : f32 to vector<8x32xf32>
    %28 = arith.maximumf %26, %27 : vector<8x32xf32>
    %c1_22 = arith.constant 1 : index
    %c0_23 = arith.constant 0 : index
    %c0_24 = arith.constant 0 : index
    %29 = vector.load %arg4[%c1_22, %c0_23, %c0_24] : memref<2x32x32xbf16, #tpu.memory_space<vmem>>, vector<1x32x32xbf16>
    %30 = vector.shape_cast %29 : vector<1x32x32xbf16> to vector<32x32xbf16>
    %31 = arith.truncf %28 : vector<8x32xf32> to vector<8x32xbf16>
    %cst_25 = arith.constant dense<0.000000e+00> : vector<8x32xf32>
    %32 = tpu.matmul %31, %30, %cst_25 {dimension_numbers = #tpu.dot_dimension_numbers<[1], [0], [0], [1], [0, 0, 1, 1], [], []>} : vector<8x32xbf16>, vector<32x32xbf16>, vector<8x32xf32> -> vector<8x32xf32>
    %c1_26 = arith.constant 1 : index
    %c0_27 = arith.constant 0 : index
    %c0_28 = arith.constant 0 : index
    %33 = vector.load %arg5[%c1_26, %c0_27, %c0_28] : memref<2x1x32xf32, #tpu.memory_space<vmem>>, vector<1x1x32xf32>
    %34 = vector.shape_cast %33 : vector<1x1x32xf32> to vector<1x32xf32>
    %35 = vector.broadcast %34 : vector<1x32xf32> to vector<8x32xf32>
    %36 = arith.addf %32, %35 : vector<8x32xf32>
    %c0_29 = arith.constant 0 : index
    %c0_30 = arith.constant 0 : index
    %37 = vector.load %arg6[%c0_29, %c0_30] : memref<8x32xf32, #tpu.memory_space<vmem>>, vector<8x32xf32>
    tpu.vector_store %arg6[%c0_29, %c0_30], %36 {strides = array<i32>} : memref<8x32xf32, #tpu.memory_space<vmem>>, vector<8x32xf32>,
    return
  }
  func.func @transform_0(%arg0: i32) -> (i32, i32) {
    %c0_i32 = arith.constant 0 : i32
    %c0_i32_0 = arith.constant 0 : i32
    return %arg0, %c0_i32 : i32, i32
  }
  func.func @transform_1(%arg0: i32) -> (i32, i32, i32) {
    %c0_i32 = arith.constant 0 : i32
    %c0_i32_0 = arith.constant 0 : i32
    %c0_i32_1 = arith.constant 0 : i32
    %c0_i32_2 = arith.constant 0 : i32
    return %c0_i32, %c0_i32_0, %c0_i32_1 : i32, i32, i32
  }
  func.func @transform_2(%arg0: i32) -> (i32, i32, i32) {
    %c0_i32 = arith.constant 0 : i32
    %c0_i32_0 = arith.constant 0 : i32
    %c0_i32_1 = arith.constant 0 : i32
    %c0_i32_2 = arith.constant 0 : i32
    return %c0_i32, %c0_i32_0, %c0_i32_1 : i32, i32, i32
  }
  func.func @transform_3(%arg0: i32) -> (i32, i32, i32) {
    %c0_i32 = arith.constant 0 : i32
    %c0_i32_0 = arith.constant 0 : i32
    %c0_i32_1 = arith.constant 0 : i32
    %c0_i32_2 = arith.constant 0 : i32
    return %c0_i32, %c0_i32_0, %c0_i32_1 : i32, i32, i32
  }
  func.func @transform_4(%arg0: i32) -> (i32, i32, i32) {
    %c0_i32 = arith.constant 0 : i32
    %c0_i32_0 = arith.constant 0 : i32
    %c0_i32_1 = arith.constant 0 : i32
    %c0_i32_2 = arith.constant 0 : i32
    return %c0_i32, %c0_i32_0, %c0_i32_1 : i32, i32, i32
  }
  func.func @transform_5(%arg0: i32) -> (i32, i32) {
    %c0_i32 = arith.constant 0 : i32
    %c0_i32_0 = arith.constant 0 : i32
    return %arg0, %c0_i32 : i32, i32
  }
}

</mosaic_0001>

<llo_original>
// kernel: multi_mlp_forward.1
$region0: #{multi_mlp_forward.1}
  #allocation0 [shape = 'u32[]', space=smem, size = 0x4, offset = 0x4, fixed_abs, tag = 'smem constant byte address 0x4 - core index']
  #allocation1 [shape = 'u32[144,128]{1,0:T(1,128)}', space=vmem, size = 0x12000, scoped, tag = 'internal scratch']
  %s0 = inlined_call_operand.hbm [shape: f32[8,32], index: 0, kind: input, shape index: {}]
  %s1 = inlined_call_operand.hbm [shape: bf16[2,32,32], index: 1, kind: input, shape index: {}]
  %s2 = inlined_call_operand.vmem [shape: f32[2,1,32], index: 2, kind: input, shape index: {}]
  %s3 = inlined_call_operand.hbm [shape: bf16[2,32,32], index: 3, kind: input, shape index: {}]
  %s4 = inlined_call_operand.vmem [shape: f32[2,1,32], index: 4, kind: input, shape index: {}]
  %s5 = inlined_call_operand.hbm [shape: f32[8,32], index: 5, kind: output, shape index: {}]
  %s6 = sld [smem:[#allocation0]]
  $region42: #{multi_mlp_forward.1} parent=0
    _
  %s8 = ssub.s32 1, %s6
  %s9 = scalar_select 0, %s8, %s6
  $region1: #{multi_mlp_forward.1} parent=0
    #allocation2 [shape = 'u8[4096]{0}', space=vmem, size = 0x1000, scoped, tag = 'input window, operand 0, single buffered']
    #allocation3 [shape = 's32[1]{0}', space=sflag, size = 0x4, scoped, tag = 'scoped memory for multi_mlp_forward.1']
    #allocation4 [shape = 's32[1]{0}', space=sflag, size = 0x4, scoped, tag = 'scoped memory for multi_mlp_forward.1']
    #allocation5 [shape = 'u8[16384]{0}', space=vmem, size = 0x4000, scoped, tag = 'input window, operand 1, single buffered']
    #allocation6 [shape = 's32[1]{0}', space=sflag, size = 0x4, scoped, tag = 'scoped memory for multi_mlp_forward.1']
    #allocation7 [shape = 'u8[16384]{0}', space=vmem, size = 0x4000, scoped, tag = 'input window, operand 3, single buffered']
    #allocation8 [shape = 'u8[4096]{0}', space=vmem, size = 0x1000, scoped, tag = 'output window, operand 0, single buffered']
    %10 = vsyncpa [#allocation3], 0
    %11 = vsyncpa [#allocation6], 0
    %12 = vsyncpa [#allocation4], 0
    // Predicated region
    $region2: #{multi_mlp_forward.1} parent=1 // pred_check
      _
    $region3: #{multi_mlp_forward.1} parent=1 // pred_check_branch
      %14 = sbr.rel (0) target = $region5
    $region4: #{multi_mlp_forward.1} parent=1 // pred_region
      %s16 = ssub.s32 128, 128
      %17 = vsyncadd [#allocation3], %s16
      %s19 = sshll.u32 [#allocation2], 4
      %s20 = int_to_ptr.vmem [resolvable:$true] %s19
      %22 = dma.hbm_to_vmem [thread:$0]  %s0, 128, %s20, [#allocation3]
    $region5: #{multi_mlp_forward.1} parent=1 // pred_fallthru
      _
    // Predicated region
    $region6: #{multi_mlp_forward.1} parent=1 // pred_check
      _
    $region7: #{multi_mlp_forward.1} parent=1 // pred_check_branch
      %24 = sbr.rel (0) target = $region9
    $region8: #{multi_mlp_forward.1} parent=1 // pred_region
      %s26 = ssub.s32 512, 512
      %27 = vsyncadd [#allocation6], %s26
      %s28 = sshll.u32 [#allocation5], 4
      %s29 = int_to_ptr.vmem [resolvable:$true] %s28
      %34 = dma.hbm_to_vmem [thread:$0]  %s1, 512, %s29, [#allocation6], 64, 64, 4
    $region9: #{multi_mlp_forward.1} parent=1 // pred_fallthru
      _
    // Predicated region
    $region10: #{multi_mlp_forward.1} parent=1 // pred_check
      _
    $region11: #{multi_mlp_forward.1} parent=1 // pred_check_branch
      %36 = sbr.rel (0) target = $region13
    $region12: #{multi_mlp_forward.1} parent=1 // pred_region
      _
    $region13: #{multi_mlp_forward.1} parent=1 // pred_fallthru
      _
    // Predicated region
    $region14: #{multi_mlp_forward.1} parent=1 // pred_check
      _
    $region15: #{multi_mlp_forward.1} parent=1 // pred_check_branch
      %38 = sbr.rel (0) target = $region17
    $region16: #{multi_mlp_forward.1} parent=1 // pred_region
      %s40 = ssub.s32 512, 512
      %41 = vsyncadd [#allocation6], %s40
      %s42 = sshll.u32 [#allocation7], 4
      %s43 = int_to_ptr.vmem [resolvable:$true] %s42
      %48 = dma.hbm_to_vmem [thread:$0]  %s3, 512, %s43, [#allocation6], 64, 64, 4
    $region17: #{multi_mlp_forward.1} parent=1 // pred_fallthru
      _
    // Predicated region
    $region18: #{multi_mlp_forward.1} parent=1 // pred_check
      _
    $region19: #{multi_mlp_forward.1} parent=1 // pred_check_branch
      %50 = sbr.rel (0) target = $region21
    $region20: #{multi_mlp_forward.1} parent=1 // pred_region
      _
    $region21: #{multi_mlp_forward.1} parent=1 // pred_fallthru
      _
    // Predicated region
    $region22: #{multi_mlp_forward.1} parent=1 // pred_check
      _
    $region23: #{multi_mlp_forward.1} parent=1 // pred_check_branch
      %52 = sbr.rel (0) target = $region25
    $region24: #{multi_mlp_forward.1} parent=1 // pred_region
      %53 = dma.done [#allocation3], 128
    $region25: #{multi_mlp_forward.1} parent=1 // pred_fallthru
      _
    // Predicated region
    $region26: #{multi_mlp_forward.1} parent=1 // pred_check
      _
    $region27: #{multi_mlp_forward.1} parent=1 // pred_check_branch
      %55 = sbr.rel (0) target = $region29
    $region28: #{multi_mlp_forward.1} parent=1 // pred_region
      %56 = dma.done [#allocation6], 512
    $region29: #{multi_mlp_forward.1} parent=1 // pred_fallthru
      _
    // Predicated region
    $region30: #{multi_mlp_forward.1} parent=1 // pred_check
      _
    $region31: #{multi_mlp_forward.1} parent=1 // pred_check_branch
      %58 = sbr.rel (0) target = $region33
    $region32: #{multi_mlp_forward.1} parent=1 // pred_region
      %59 = dma.done [#allocation6], 512
    $region33: #{multi_mlp_forward.1} parent=1 // pred_fallthru
      _
    %v61 = vld [vmem:[#allocation2] sm:$0xff]
    %v62 = vld [vmem:[#allocation5] sm:$0xf]
    %v63 = vld [vmem:[#allocation5 + $0x4] sm:$0xf]
    %v64 = vld [vmem:[#allocation5 + $0x8] sm:$0xf]
    %v65 = vld [vmem:[#allocation5 + $0xc] sm:$0xf]
    %v66 = vpack.c.bf16 %v61, %v61
    %v67 = vld [vmem:[%s2] sm:$0x1]
    %v69 = vlaneseq
    %v70 = vshrl.u32 %v69, 7
    %v71 = vsub.s32 0, %v70
    %v72 = vrot.slane %v67, %v71
    %v78 = vunpack.c.l.b16 %v62
    %v79 = vunpack.c.l.b16 %v63
    %v80 = vunpack.c.l.b16 %v64
    %v81 = vunpack.c.l.b16 %v65
    %v82 = vpack.c.b16 %v79, %v78
    %v83 = vpack.c.b16 %v81, %v80
    %vm86 = vcmask 261120
    %v88 = vsel %vm86, %v66, 0
    %90 = vmatprep.subr.bf16.mxu0 0
    %91 = vmatpush1.bf16.msra.mxu0 %v82
    %92 = vmatprep.subr.bf16.mxu0 0
    %93 = vmatpush1.bf16.msra.mxu0 %v83
    %94 = vmatprep.subr.bf16.mxu0 0
    %95 = vmatpush1.bf16.msra.mxu0 0
    %96 = vmatprep.subr.bf16.mxu0 0
    %97 = vmatpush1.bf16.msra.mxu0 0
    %98 = vmatprep.subr.bf16.mxu0 0
    %99 = vmatpush1.bf16.msra.mxu0 0
    %100 = vmatprep.subr.bf16.mxu0 0
    %101 = vmatpush1.bf16.msra.mxu0 0
    %102 = vmatprep.subr.bf16.mxu0 0
    %103 = vmatpush1.bf16.msra.mxu0 0
    %104 = vmatprep.subr.bf16.mxu0 0
    %105 = vmatpush1.bf16.msra.mxu0 0
    %106 = vmatprep.subr.bf16.mxu0 0
    %107 = vmatpush1.bf16.msra.mxu0 0
    %108 = vmatprep.subr.bf16.mxu0 0
    %109 = vmatpush1.bf16.msra.mxu0 0
    %110 = vmatprep.subr.bf16.mxu0 0
    %111 = vmatpush1.bf16.msra.mxu0 0
    %112 = vmatprep.subr.bf16.mxu0 0
    %113 = vmatpush1.bf16.msra.mxu0 0
    %114 = vmatprep.subr.bf16.mxu0 0
    %115 = vmatpush1.bf16.msra.mxu0 0
    %116 = vmatprep.subr.bf16.mxu0 0
    %117 = vmatpush1.bf16.msra.mxu0 0
    %118 = vmatprep.subr.bf16.mxu0 0
    %119 = vmatpush1.bf16.msra.mxu0 0
    %120 = vmatprep.subr.bf16.mxu0 0
    %121 = vmatpush1.bf16.msra.mxu0 0
    %122 = vmatprep.mubr.bf16.mxu0 0
    %123 = vmatmul.mubr.bf16.gmra.mrb[0].mxu0 %v88
    %v124 = vpop.f32.mrb[0].mxu0
    %v125 = vadd.f32 %v72, %v124
    %v126 = vpop.f32.mrb[0].mxu0
    %v127 = vpop.f32.mrb[0].mxu0
    %v128 = vpop.f32.mrb[0].mxu0
    %129 = vdwg.mxu0
    %v130 = vmax.f32 %v125, 0.0
    %v131 = vld [vmem:[#allocation7] sm:$0xf]
    %v132 = vld [vmem:[#allocation7 + $0x4] sm:$0xf]
    %v133 = vld [vmem:[#allocation7 + $0x8] sm:$0xf]
    %v134 = vld [vmem:[#allocation7 + $0xc] sm:$0xf]
    %v135 = vpack.c.bf16 %v130, %v130
    %v136 = vld [vmem:[%s4] sm:$0x1]
    %v138 = vlaneseq
    %v139 = vshrl.u32 %v138, 7
    %v140 = vsub.s32 0, %v139
    %v141 = vrot.slane %v136, %v140
    %v147 = vunpack.c.l.b16 %v131
    %v148 = vunpack.c.l.b16 %v132
    %v149 = vunpack.c.l.b16 %v133
    %v150 = vunpack.c.l.b16 %v134
    %v151 = vpack.c.b16 %v148, %v147
    %v152 = vpack.c.b16 %v150, %v149
    %v156 = vsel %vm86, %v135, 0
    %158 = vmatprep.subr.bf16.mxu0 0
    %159 = vmatpush1.bf16.msra.mxu0 %v151
    %160 = vmatprep.subr.bf16.mxu0 0
    %161 = vmatpush1.bf16.msra.mxu0 %v152
    %162 = vmatprep.subr.bf16.mxu0 0
    %163 = vmatpush1.bf16.msra.mxu0 0
    %164 = vmatprep.subr.bf16.mxu0 0
    %165 = vmatpush1.bf16.msra.mxu0 0
    %166 = vmatprep.subr.bf16.mxu0 0
    %167 = vmatpush1.bf16.msra.mxu0 0
    %168 = vmatprep.subr.bf16.mxu0 0
    %169 = vmatpush1.bf16.msra.mxu0 0
    %170 = vmatprep.subr.bf16.mxu0 0
    %171 = vmatpush1.bf16.msra.mxu0 0
    %172 = vmatprep.subr.bf16.mxu0 0
    %173 = vmatpush1.bf16.msra.mxu0 0
    %174 = vmatprep.subr.bf16.mxu0 0
    %175 = vmatpush1.bf16.msra.mxu0 0
    %176 = vmatprep.subr.bf16.mxu0 0
    %177 = vmatpush1.bf16.msra.mxu0 0
    %178 = vmatprep.subr.bf16.mxu0 0
    %179 = vmatpush1.bf16.msra.mxu0 0
    %180 = vmatprep.subr.bf16.mxu0 0
    %181 = vmatpush1.bf16.msra.mxu0 0
    %182 = vmatprep.subr.bf16.mxu0 0
    %183 = vmatpush1.bf16.msra.mxu0 0
    %184 = vmatprep.subr.bf16.mxu0 0
    %185 = vmatpush1.bf16.msra.mxu0 0
    %186 = vmatprep.subr.bf16.mxu0 0
    %187 = vmatpush1.bf16.msra.mxu0 0
    %188 = vmatprep.subr.bf16.mxu0 0
    %189 = vmatpush1.bf16.msra.mxu0 0
    %190 = vmatprep.mubr.bf16.mxu0 0
    %191 = vmatmul.mubr.bf16.gmra.mrb[0].mxu0 %v156
    %v192 = vpop.f32.mrb[0].mxu0
    %v193 = vadd.f32 %v141, %v192
    %v194 = vpop.f32.mrb[0].mxu0
    %v195 = vpop.f32.mrb[0].mxu0
    %v196 = vpop.f32.mrb[0].mxu0
    %197 = vdwg.mxu0
    %s198 = scalar_lea.vmem [#allocation5], 16
    %v199 = vld [vmem:[%s198] sm:$0xf]
    %v200 = vld [vmem:[%s198 + $0x4] sm:$0xf]
    %v201 = vld [vmem:[%s198 + $0x8] sm:$0xf]
    %v202 = vld [vmem:[%s198 + $0xc] sm:$0xf]
    %v203 = vpack.c.bf16 %v193, %v193
    %s204 = scalar_lea.vmem %s2, 1
    %v205 = vld [vmem:[%s204] sm:$0x1]
    %v207 = vlaneseq
    %v208 = vshrl.u32 %v207, 7
    %v209 = vsub.s32 0, %v208
    %v210 = vrot.slane %v205, %v209
    %v216 = vunpack.c.l.b16 %v199
    %v217 = vunpack.c.l.b16 %v200
    %v218 = vunpack.c.l.b16 %v201
    %v219 = vunpack.c.l.b16 %v202
    %v220 = vpack.c.b16 %v217, %v216
    %v221 = vpack.c.b16 %v219, %v218
    %v225 = vsel %vm86, %v203, 0
    %227 = vmatprep.subr.bf16.mxu0 0
    %228 = vmatpush1.bf16.msra.mxu0 %v220
    %229 = vmatprep.subr.bf16.mxu0 0
    %230 = vmatpush1.bf16.msra.mxu0 %v221
    %231 = vmatprep.subr.bf16.mxu0 0
    %232 = vmatpush1.bf16.msra.mxu0 0
    %233 = vmatprep.subr.bf16.mxu0 0
    %234 = vmatpush1.bf16.msra.mxu0 0
    %235 = vmatprep.subr.bf16.mxu0 0
    %236 = vmatpush1.bf16.msra.mxu0 0
    %237 = vmatprep.subr.bf16.mxu0 0
    %238 = vmatpush1.bf16.msra.mxu0 0
    %239 = vmatprep.subr.bf16.mxu0 0
    %240 = vmatpush1.bf16.msra.mxu0 0
    %241 = vmatprep.subr.bf16.mxu0 0
    %242 = vmatpush1.bf16.msra.mxu0 0
    %243 = vmatprep.subr.bf16.mxu0 0
    %244 = vmatpush1.bf16.msra.mxu0 0
    %245 = vmatprep.subr.bf16.mxu0 0
    %246 = vmatpush1.bf16.msra.mxu0 0
    %247 = vmatprep.subr.bf16.mxu0 0
    %248 = vmatpush1.bf16.msra.mxu0 0
    %249 = vmatprep.subr.bf16.mxu0 0
    %250 = vmatpush1.bf16.msra.mxu0 0
    %251 = vmatprep.subr.bf16.mxu0 0
    %252 = vmatpush1.bf16.msra.mxu0 0
    %253 = vmatprep.subr.bf16.mxu0 0
    %254 = vmatpush1.bf16.msra.mxu0 0
    %255 = vmatprep.subr.bf16.mxu0 0
    %256 = vmatpush1.bf16.msra.mxu0 0
    %257 = vmatprep.subr.bf16.mxu0 0
    %258 = vmatpush1.bf16.msra.mxu0 0
    %259 = vmatprep.mubr.bf16.mxu0 0
    %260 = vmatmul.mubr.bf16.gmra.mrb[0].mxu0 %v225
    %v261 = vpop.f32.mrb[0].mxu0
    %v262 = vadd.f32 %v210, %v261
    %v263 = vpop.f32.mrb[0].mxu0
    %v264 = vpop.f32.mrb[0].mxu0
    %v265 = vpop.f32.mrb[0].mxu0
    %266 = vdwg.mxu0
    %v267 = vmax.f32 %v262, 0.0
    %s268 = scalar_lea.vmem [#allocation7], 16
    %v269 = vld [vmem:[%s268] sm:$0xf]
    %v270 = vld [vmem:[%s268 + $0x4] sm:$0xf]
    %v271 = vld [vmem:[%s268 + $0x8] sm:$0xf]
    %v272 = vld [vmem:[%s268 + $0xc] sm:$0xf]
    %v273 = vpack.c.bf16 %v267, %v267
    %s274 = scalar_lea.vmem %s4, 1
    %v275 = vld [vmem:[%s274] sm:$0x1]
    %v277 = vlaneseq
    %v278 = vshrl.u32 %v277, 7
    %v279 = vsub.s32 0, %v278
    %v280 = vrot.slane %v275, %v279
    %v286 = vunpack.c.l.b16 %v269
    %v287 = vunpack.c.l.b16 %v270
    %v288 = vunpack.c.l.b16 %v271
    %v289 = vunpack.c.l.b16 %v272
    %v290 = vpack.c.b16 %v287, %v286
    %v291 = vpack.c.b16 %v289, %v288
    %v295 = vsel %vm86, %v273, 0
    %297 = vmatprep.subr.bf16.mxu0 0
    %298 = vmatpush1.bf16.msra.mxu0 %v290
    %299 = vmatprep.subr.bf16.mxu0 0
    %300 = vmatpush1.bf16.msra.mxu0 %v291
    %301 = vmatprep.subr.bf16.mxu0 0
    %302 = vmatpush1.bf16.msra.mxu0 0
    %303 = vmatprep.subr.bf16.mxu0 0
    %304 = vmatpush1.bf16.msra.mxu0 0
    %305 = vmatprep.subr.bf16.mxu0 0
    %306 = vmatpush1.bf16.msra.mxu0 0
    %307 = vmatprep.subr.bf16.mxu0 0
    %308 = vmatpush1.bf16.msra.mxu0 0
    %309 = vmatprep.subr.bf16.mxu0 0
    %310 = vmatpush1.bf16.msra.mxu0 0
    %311 = vmatprep.subr.bf16.mxu0 0
    %312 = vmatpush1.bf16.msra.mxu0 0
    %313 = vmatprep.subr.bf16.mxu0 0
    %314 = vmatpush1.bf16.msra.mxu0 0
    %315 = vmatprep.subr.bf16.mxu0 0
    %316 = vmatpush1.bf16.msra.mxu0 0
    %317 = vmatprep.subr.bf16.mxu0 0
    %318 = vmatpush1.bf16.msra.mxu0 0
    %319 = vmatprep.subr.bf16.mxu0 0
    %320 = vmatpush1.bf16.msra.mxu0 0
    %321 = vmatprep.subr.bf16.mxu0 0
    %322 = vmatpush1.bf16.msra.mxu0 0
    %323 = vmatprep.subr.bf16.mxu0 0
    %324 = vmatpush1.bf16.msra.mxu0 0
    %325 = vmatprep.subr.bf16.mxu0 0
    %326 = vmatpush1.bf16.msra.mxu0 0
    %327 = vmatprep.subr.bf16.mxu0 0
    %328 = vmatpush1.bf16.msra.mxu0 0
    %329 = vmatprep.mubr.bf16.mxu0 0
    %330 = vmatmul.mubr.bf16.gmra.mrb[0].mxu0 %v295
    %v331 = vpop.f32.mrb[0].mxu0
    %v332 = vadd.f32 %v280, %v331
    %v333 = vpop.f32.mrb[0].mxu0
    %v334 = vpop.f32.mrb[0].mxu0
    %v335 = vpop.f32.mrb[0].mxu0
    %336 = vdwg.mxu0
    %337 = vst.msk [vmem:[#allocation8] sm:$0xff] %vm86, %v332
    // Predicated region
    $region34: #{multi_mlp_forward.1} parent=1 // pred_check
      _
    $region35: #{multi_mlp_forward.1} parent=1 // pred_check_branch
      %339 = sbr.rel (0) target = $region37
    $region36: #{multi_mlp_forward.1} parent=1 // pred_region
      %s341 = ssub.s32 128, 128
      %342 = vsyncadd [#allocation4], %s341
      %s344 = sshll.u32 [#allocation8], 4
      %s345 = int_to_ptr.vmem [resolvable:$true] %s344
      %347 = dma.vmem_to_hbm [thread:$0]  %s345, 128, %s5, [#allocation4]
    $region37: #{multi_mlp_forward.1} parent=1 // pred_fallthru
      _
    // Predicated region
    $region38: #{multi_mlp_forward.1} parent=1 // pred_check
      _
    $region39: #{multi_mlp_forward.1} parent=1 // pred_check_branch
      %349 = sbr.rel (0) target = $region41
    $region40: #{multi_mlp_forward.1} parent=1 // pred_region
      %350 = dma.done [#allocation4], 128
    $region41: #{multi_mlp_forward.1} parent=1 // pred_fallthru
      _
    %351 = vsyncpa [#allocation3], 1
    %352 = vsyncpa [#allocation6], 1
    %353 = vsyncpa [#allocation4], 1

</llo_original>
